<compile_context>
chip_gen: v6e
topology: v6e:2x2x1
jax: 0.10.0
libtpu: 0.0.40
codegen_flags: <defaults>
</compile_context>

<pallas_src>
import jax
import jax.numpy as jnp
from jax.experimental import pallas as pl
from jax.experimental.pallas import tpu as pltpu

INPUT_DIM = 64          # input_shape (int -> non-CNN path)
HIDDEN = 32             # args.ENCODER_HIDDEN_DIM
H2 = HIDDEN // 2        # 16
ZDIM = HIDDEN // 4      # 8  (z_embed_dim)
LANES = 128             # packed-input / slab lane width
BATCH = 16


# ---------------------------------------------------------------------------
# Parameter-slab layout: every block starts at an 8-aligned row, lanes padded
# to 128.  Same dict drives both the wrapper-side packer and the kernel views.
# ---------------------------------------------------------------------------
def _build_layout():
    layout = {}
    row = 0

    def add(name, nrows):
        nonlocal row
        layout[name] = row
        row += -(-nrows // 8) * 8     # round rows up to a multiple of 8

    add("w1p", LANES)                 # (128, 32): rows [ZDIM, ZDIM+64) hold w1, rest zero
    add("w2", HIDDEN)                 # (32, 16)
    add("w3", H2)                     # (16, 8)
    add("wih_r", ZDIM); add("wih_z", ZDIM); add("wih_n", ZDIM)   # (8, 8) each
    add("whh_r", ZDIM); add("whh_z", ZDIM); add("whh_n", ZDIM)   # (8, 8) each
    add("w4", ZDIM)                   # (8, 16)
    add("w5", H2)                     # (16, 32)
    add("w6", HIDDEN)                 # (32, 64)
    add("bias", 16)                   # 10 bias rows, padded to 16
    return layout, row


_LAYOUT, _SLAB_ROWS = _build_layout()
_BIAS_ROW = _LAYOUT["bias"]
# bias row indices inside the bias block
_B1, _B2, _B3, _BR, _BZ, _BIN, _BHN, _B4, _B5, _B6 = range(10)


# ---------------------------------------------------------------------------
# Kernel (single invocation: whole batch, all params resident in VMEM)
# ---------------------------------------------------------------------------
def _autoencoder_kernel(xin_ref, slab_ref, enc_ref, dec_ref):
    f32 = jnp.float32

    def w(name, rows, cols):
        r = _LAYOUT[name]
        return slab_ref[r:r + rows, 0:cols]          # static view of the slab

    def b(idx, cols):
        r = _BIAS_ROW + idx
        return slab_ref[r:r + 1, 0:cols]             # (1, cols) broadcast row

    xin = xin_ref[...]                               # (B, 128) = [h_prev | x | 0]
    h_prev = xin[:, 0:ZDIM]                          # offset-0 lane slice, (B, 8)

    # ---- encoder: Linear -> ReLU -> Linear -> ReLU -> Linear ----
    # First layer contracts K=128 directly from the packed input; the h_prev /
    # zero lanes hit zero rows of w1p, so the result equals x @ w1.
    h1 = jnp.maximum(
        jnp.dot(xin, w("w1p", LANES, HIDDEN), preferred_element_type=f32) + b(_B1, HIDDEN), 0.0)
    h2 = jnp.maximum(
        jnp.dot(h1, w("w2", HIDDEN, H2), preferred_element_type=f32) + b(_B2, H2), 0.0)
    z = jnp.dot(h2, w("w3", H2, ZDIM), preferred_element_type=f32) + b(_B3, ZDIM)

    # ---- GRUCell (PyTorch semantics, gate order r, z, n; gates pre-split) ----
    r = jax.nn.sigmoid(
        jnp.dot(z, w("wih_r", ZDIM, ZDIM), preferred_element_type=f32)
        + jnp.dot(h_prev, w("whh_r", ZDIM, ZDIM), preferred_element_type=f32)
        + b(_BR, ZDIM))
    u = jax.nn.sigmoid(
        jnp.dot(z, w("wih_z", ZDIM, ZDIM), preferred_element_type=f32)
        + jnp.dot(h_prev, w("whh_z", ZDIM, ZDIM), preferred_element_type=f32)
        + b(_BZ, ZDIM))
    hn = jnp.dot(h_prev, w("whh_n", ZDIM, ZDIM), preferred_element_type=f32) + b(_BHN, ZDIM)
    n = jnp.tanh(
        jnp.dot(z, w("wih_n", ZDIM, ZDIM), preferred_element_type=f32) + b(_BIN, ZDIM) + r * hn)
    h_new = (1.0 - u) * n + u * h_prev               # encoded, (B, 8)

    # ---- decoder: Linear -> ReLU -> Linear -> ReLU -> Linear ----
    d1 = jnp.maximum(
        jnp.dot(h_new, w("w4", ZDIM, H2), preferred_element_type=f32) + b(_B4, H2), 0.0)
    d2 = jnp.maximum(
        jnp.dot(d1, w("w5", H2, HIDDEN), preferred_element_type=f32) + b(_B5, HIDDEN), 0.0)
    dec = jnp.dot(d2, w("w6", HIDDEN, INPUT_DIM), preferred_element_type=f32) + b(_B6, INPUT_DIM)

    enc_ref[...] = h_new.astype(enc_ref.dtype)
    dec_ref[...] = dec.astype(dec_ref.dtype)


# ---------------------------------------------------------------------------
# Wrapper
# ---------------------------------------------------------------------------
def _cost_estimate(B):
    mnk = ([(B, HIDDEN, LANES), (B, H2, HIDDEN), (B, ZDIM, H2)]
           + [(B, ZDIM, ZDIM)] * 6
           + [(B, H2, ZDIM), (B, HIDDEN, H2), (B, INPUT_DIM, HIDDEN)])
    flops = sum(2 * m * n * k for m, n, k in mnk)
    transcendentals = 3 * B * ZDIM                       # 2x sigmoid + 1x tanh
    bytes_accessed = 4 * (B * LANES + _SLAB_ROWS * LANES + B * ZDIM + B * INPUT_DIM)
    return pl.CostEstimate(flops=flops, transcendentals=transcendentals,
                           bytes_accessed=bytes_accessed)


def autoencoder_forward(x, hidden, slab):
    """x: (B, INPUT_DIM), hidden: (B, ZDIM), slab: packed params.
    Returns (encoded (B, ZDIM), decoded (B, INPUT_DIM))."""
    B = x.shape[0]
    # Lane-dense packed input [h_prev | x | 0] -> single input DMA, full-width load.
    # (A real caller would produce this layout directly instead of concatenating.)
    pad = jnp.zeros((B, LANES - ZDIM - INPUT_DIM), jnp.float32)
    xin = jnp.concatenate([hidden.astype(jnp.float32), x.astype(jnp.float32), pad], axis=1)

    enc, dec = pl.pallas_call(
        _autoencoder_kernel,
        out_shape=(jax.ShapeDtypeStruct((B, ZDIM), jnp.float32),
                   jax.ShapeDtypeStruct((B, INPUT_DIM), jnp.float32)),
        # No grid: single step over the whole batch, all arrays resident in VMEM.
        in_specs=[pl.BlockSpec(memory_space=pltpu.MemorySpace.VMEM),
                  pl.BlockSpec(memory_space=pltpu.MemorySpace.VMEM)],
        out_specs=(pl.BlockSpec(memory_space=pltpu.MemorySpace.VMEM),
                   pl.BlockSpec(memory_space=pltpu.MemorySpace.VMEM)),
        cost_estimate=_cost_estimate(B),
    )(xin, slab)
    return enc, dec


# ---------------------------------------------------------------------------
# Parameter construction / packing / reference
# ---------------------------------------------------------------------------
def make_params(key):
    """Deterministic synthetic parameters, pre-transposed to (in, out) layout."""
    def linear(k, d_in, d_out):
        k1, k2 = jax.random.split(k)
        bound = 1.0 / jnp.sqrt(d_in)
        wmat = jax.random.uniform(k1, (d_in, d_out), jnp.float32, -bound, bound)
        bvec = jax.random.uniform(k2, (1, d_out), jnp.float32, -bound, bound)
        return wmat, bvec

    keys = jax.random.split(key, 8)
    w1, b1 = linear(keys[0], INPUT_DIM, HIDDEN)
    w2, b2 = linear(keys[1], HIDDEN, H2)
    w3, b3 = linear(keys[2], H2, ZDIM)
    # GRUCell params: PyTorch weight_ih (3Z, Z) -> transposed (Z, 3Z); same for hh.
    wih, bih = linear(keys[3], ZDIM, 3 * ZDIM)
    whh, bhh = linear(keys[4], ZDIM, 3 * ZDIM)
    w4, b4 = linear(keys[5], ZDIM, H2)
    w5, b5 = linear(keys[6], H2, HIDDEN)
    w6, b6 = linear(keys[7], HIDDEN, INPUT_DIM)
    return (w1, b1, w2, b2, w3, b3, wih, bih, whh, bhh, w4, b4, w5, b5, w6, b6)


def pack_params(params):
    """Wrapper-side layout plumbing: one f32 slab, GRU gates pre-split,
    w1 placed at rows [ZDIM, ZDIM+INPUT_DIM) of a 128-row block so the first
    encoder matmul contracts the packed [h_prev | x | 0] input directly."""
    (w1, b1, w2, b2, w3, b3, wih, bih, whh, bhh, w4, b4, w5, b5, w6, b6) = params
    Z = ZDIM
    slab = jnp.zeros((_SLAB_ROWS, LANES), jnp.float32)

    def put(s, name, mat, row_off=0):
        r = _LAYOUT[name] + row_off
        return s.at[r:r + mat.shape[0], 0:mat.shape[1]].set(mat)

    def putb(s, idx, vec):
        v = jnp.reshape(vec, (-1,))
        return s.at[_BIAS_ROW + idx, 0:v.shape[0]].set(v)

    slab = put(slab, "w1p", w1, row_off=Z)          # rows [0,Z) and [Z+64,128) stay zero
    slab = put(slab, "w2", w2)
    slab = put(slab, "w3", w3)
    slab = put(slab, "wih_r", wih[:, 0:Z]);         slab = put(slab, "whh_r", whh[:, 0:Z])
    slab = put(slab, "wih_z", wih[:, Z:2 * Z]);     slab = put(slab, "whh_z", whh[:, Z:2 * Z])
    slab = put(slab, "wih_n", wih[:, 2 * Z:3 * Z]); slab = put(slab, "whh_n", whh[:, 2 * Z:3 * Z])
    slab = put(slab, "w4", w4)
    slab = put(slab, "w5", w5)
    slab = put(slab, "w6", w6)

    slab = putb(slab, _B1, b1)
    slab = putb(slab, _B2, b2)
    slab = putb(slab, _B3, b3)
    slab = putb(slab, _BR, bih[:, 0:Z] + bhh[:, 0:Z])            # r-gate bias (folded)
    slab = putb(slab, _BZ, bih[:, Z:2 * Z] + bhh[:, Z:2 * Z])    # z-gate bias (folded)
    slab = putb(slab, _BIN, bih[:, 2 * Z:3 * Z])                 # b_in (outside r*)
    slab = putb(slab, _BHN, bhh[:, 2 * Z:3 * Z])                 # b_hn (inside r*)
    slab = putb(slab, _B4, b4)
    slab = putb(slab, _B5, b5)
    slab = putb(slab, _B6, b6)
    return slab


def reference_forward(x, hidden, params):
    (w1, b1, w2, b2, w3, b3, wih, bih, whh, bhh, w4, b4, w5, b5, w6, b6) = params
    h1 = jnp.maximum(x @ w1 + b1, 0.0)
    h2 = jnp.maximum(h1 @ w2 + b2, 0.0)
    z = h2 @ w3 + b3
    gi = z @ wih + bih
    gh = hidden @ whh + bhh
    r = jax.nn.sigmoid(gi[:, :ZDIM] + gh[:, :ZDIM])
    u = jax.nn.sigmoid(gi[:, ZDIM:2 * ZDIM] + gh[:, ZDIM:2 * ZDIM])
    n = jnp.tanh(gi[:, 2 * ZDIM:] + r * gh[:, 2 * ZDIM:])
    enc = (1.0 - u) * n + u * hidden
    d1 = jnp.maximum(enc @ w4 + b4, 0.0)
    d2 = jnp.maximum(d1 @ w5 + b5, 0.0)
    dec = d2 @ w6 + b6
    return enc, dec


if __name__ == "__main__":
    key = jax.random.PRNGKey(0)
    kx, kh, kp = jax.random.split(key, 3)
    x = jax.random.normal(kx, (BATCH, INPUT_DIM), jnp.float32)
    hidden = jax.random.normal(kh, (BATCH, ZDIM), jnp.float32)
    params = make_params(kp)
    slab = pack_params(params)

    enc, dec = autoencoder_forward(x, hidden, slab)
    jax.block_until_ready((enc, dec))

    enc_ref, dec_ref = reference_forward(x, hidden, params)
    assert enc.shape == (BATCH, ZDIM) and dec.shape == (BATCH, INPUT_DIM)
    assert jnp.allclose(enc, enc_ref, atol=1e-5, rtol=1e-5)
    assert jnp.allclose(dec, dec_ref, atol=1e-5, rtol=1e-5)
    print("KERNEL_OK")
</pallas_src>

<mosaic_0001>
module attributes {stable_mosaic.version = 11 : i64} {
  func.func @_autoencoder_kernel(%arg0: memref<16x128xf32, #tpu.memory_space<vmem>>, %arg1: memref<296x128xf32, #tpu.memory_space<vmem>>, %arg2: memref<16x8xf32, #tpu.memory_space<vmem>>, %arg3: memref<16x64xf32, #tpu.memory_space<vmem>>) attributes {dimension_semantics = [], scalar_prefetch = 0 : i64, scratch_operands = 0 : i64, tpu.core_type = #tpu.core_type<tc>} {
    %c0 = arith.constant 0 : index
    %c0_0 = arith.constant 0 : index
    %0 = vector.load %arg0[%c0, %c0_0] : memref<16x128xf32, #tpu.memory_space<vmem>>, vector<16x128xf32>
    %1 = vector.extract_strided_slice %0 {offsets = [0, 0], sizes = [16, 8], strides = [1, 1]} : vector<16x128xf32> to vector<16x8xf32>
    %c0_1 = arith.constant 0 : index
    %c0_2 = arith.constant 0 : index
    %2 = vector.load %arg1[%c0_1, %c0_2] : memref<296x128xf32, #tpu.memory_space<vmem>>, vector<128x32xf32>
    %cst = arith.constant dense<0.000000e+00> : vector<16x32xf32>
    %3 = tpu.matmul %0, %2, %cst {dimension_numbers = #tpu.dot_dimension_numbers<[1], [0], [0], [1], [0, 0, 1, 1], [], []>} : vector<16x128xf32>, vector<128x32xf32>, vector<16x32xf32> -> vector<16x32xf32>
    %c280 = arith.constant 280 : index
    %c0_3 = arith.constant 0 : index
    %4 = vector.load %arg1[%c280, %c0_3] : memref<296x128xf32, #tpu.memory_space<vmem>>, vector<1x32xf32>
    %5 = vector.broadcast %4 : vector<1x32xf32> to vector<16x32xf32>
    %6 = arith.addf %3, %5 : vector<16x32xf32>
    %cst_4 = arith.constant 0.000000e+00 : f32
    %7 = vector.broadcast %cst_4 : f32 to vector<16x32xf32>
    %8 = arith.maximumf %6, %7 : vector<16x32xf32>
    %c128 = arith.constant 128 : index
    %c0_5 = arith.constant 0 : index
    %9 = vector.load %arg1[%c128, %c0_5] : memref<296x128xf32, #tpu.memory_space<vmem>>, vector<32x16xf32>
    %cst_6 = arith.constant dense<0.000000e+00> : vector<16x16xf32>
    %10 = tpu.matmul %8, %9, %cst_6 {dimension_numbers = #tpu.dot_dimension_numbers<[1], [0], [0], [1], [0, 0, 1, 1], [], []>} : vector<16x32xf32>, vector<32x16xf32>, vector<16x16xf32> -> vector<16x16xf32>
    %c281 = arith.constant 281 : index
    %c0_7 = arith.constant 0 : index
    %11 = vector.load %arg1[%c281, %c0_7] : memref<296x128xf32, #tpu.memory_space<vmem>>, vector<1x16xf32>
    %12 = vector.broadcast %11 : vector<1x16xf32> to vector<16x16xf32>
    %13 = arith.addf %10, %12 : vector<16x16xf32>
    %cst_8 = arith.constant 0.000000e+00 : f32
    %14 = vector.broadcast %cst_8 : f32 to vector<16x16xf32>
    %15 = arith.maximumf %13, %14 : vector<16x16xf32>
    %c160 = arith.constant 160 : index
    %c0_9 = arith.constant 0 : index
    %16 = vector.load %arg1[%c160, %c0_9] : memref<296x128xf32, #tpu.memory_space<vmem>>, vector<16x8xf32>
    %cst_10 = arith.constant dense<0.000000e+00> : vector<16x8xf32>
    %17 = tpu.matmul %15, %16, %cst_10 {dimension_numbers = #tpu.dot_dimension_numbers<[1], [0], [0], [1], [0, 0, 1, 1], [], []>} : vector<16x16xf32>, vector<16x8xf32>, vector<16x8xf32> -> vector<16x8xf32>
    %c282 = arith.constant 282 : index
    %c0_11 = arith.constant 0 : index
    %18 = vector.load %arg1[%c282, %c0_11] : memref<296x128xf32, #tpu.memory_space<vmem>>, vector<1x8xf32>
    %19 = vector.broadcast %18 : vector<1x8xf32> to vector<16x8xf32>
    %20 = arith.addf %17, %19 : vector<16x8xf32>
    %c176 = arith.constant 176 : index
    %c0_12 = arith.constant 0 : index
    %21 = vector.load %arg1[%c176, %c0_12] : memref<296x128xf32, #tpu.memory_space<vmem>>, vector<8x8xf32>
    %cst_13 = arith.constant dense<0.000000e+00> : vector<16x8xf32>
    %22 = tpu.matmul %20, %21, %cst_13 {dimension_numbers = #tpu.dot_dimension_numbers<[1], [0], [0], [1], [0, 0, 1, 1], [], []>} : vector<16x8xf32>, vector<8x8xf32>, vector<16x8xf32> -> vector<16x8xf32>
    %c200 = arith.constant 200 : index
    %c0_14 = arith.constant 0 : index
    %23 = vector.load %arg1[%c200, %c0_14] : memref<296x128xf32, #tpu.memory_space<vmem>>, vector<8x8xf32>
    %cst_15 = arith.constant dense<0.000000e+00> : vector<16x8xf32>
    %24 = tpu.matmul %1, %23, %cst_15 {dimension_numbers = #tpu.dot_dimension_numbers<[1], [0], [0], [1], [0, 0, 1, 1], [], []>} : vector<16x8xf32>, vector<8x8xf32>, vector<16x8xf32> -> vector<16x8xf32>
    %25 = arith.addf %22, %24 : vector<16x8xf32>
    %c283 = arith.constant 283 : index
    %c0_16 = arith.constant 0 : index
    %26 = vector.load %arg1[%c283, %c0_16] : memref<296x128xf32, #tpu.memory_space<vmem>>, vector<1x8xf32>
    %27 = vector.broadcast %26 : vector<1x8xf32> to vector<16x8xf32>
    %28 = arith.addf %25, %27 : vector<16x8xf32>
    %29 = arith.negf %28 : vector<16x8xf32>
    %30 = math.exp %29 : vector<16x8xf32>
    %cst_17 = arith.constant 1.000000e+00 : f32
    %31 = vector.broadcast %cst_17 : f32 to vector<16x8xf32>
    %32 = arith.addf %31, %30 : vector<16x8xf32>
    %33 = arith.divf %31, %32 : vector<16x8xf32>
    %c184 = arith.constant 184 : index
    %c0_18 = arith.constant 0 : index
    %34 = vector.load %arg1[%c184, %c0_18] : memref<296x128xf32, #tpu.memory_space<vmem>>, vector<8x8xf32>
    %cst_19 = arith.constant dense<0.000000e+00> : vector<16x8xf32>
    %35 = tpu.matmul %20, %34, %cst_19 {dimension_numbers = #tpu.dot_dimension_numbers<[1], [0], [0], [1], [0, 0, 1, 1], [], []>} : vector<16x8xf32>, vector<8x8xf32>, vector<16x8xf32> -> vector<16x8xf32>
    %c208 = arith.constant 208 : index
    %c0_20 = arith.constant 0 : index
    %36 = vector.load %arg1[%c208, %c0_20] : memref<296x128xf32, #tpu.memory_space<vmem>>, vector<8x8xf32>
    %cst_21 = arith.constant dense<0.000000e+00> : vector<16x8xf32>
    %37 = tpu.matmul %1, %36, %cst_21 {dimension_numbers = #tpu.dot_dimension_numbers<[1], [0], [0], [1], [0, 0, 1, 1], [], []>} : vector<16x8xf32>, vector<8x8xf32>, vector<16x8xf32> -> vector<16x8xf32>
    %38 = arith.addf %35, %37 : vector<16x8xf32>
    %c284 = arith.constant 284 : index
    %c0_22 = arith.constant 0 : index
    %39 = vector.load %arg1[%c284, %c0_22] : memref<296x128xf32, #tpu.memory_space<vmem>>, vector<1x8xf32>
    %40 = vector.broadcast %39 : vector<1x8xf32> to vector<16x8xf32>
    %41 = arith.addf %38, %40 : vector<16x8xf32>
    %42 = arith.negf %41 : vector<16x8xf32>
    %43 = math.exp %42 : vector<16x8xf32>
    %cst_23 = arith.constant 1.000000e+00 : f32
    %44 = vector.broadcast %cst_23 : f32 to vector<16x8xf32>
    %45 = arith.addf %44, %43 : vector<16x8xf32>
    %46 = arith.divf %44, %45 : vector<16x8xf32>
    %c216 = arith.constant 216 : index
    %c0_24 = arith.constant 0 : index
    %47 = vector.load %arg1[%c216, %c0_24] : memref<296x128xf32, #tpu.memory_space<vmem>>, vector<8x8xf32>
    %cst_25 = arith.constant dense<0.000000e+00> : vector<16x8xf32>
    %48 = tpu.matmul %1, %47, %cst_25 {dimension_numbers = #tpu.dot_dimension_numbers<[1], [0], [0], [1], [0, 0, 1, 1], [], []>} : vector<16x8xf32>, vector<8x8xf32>, vector<16x8xf32> -> vector<16x8xf32>
    %c286 = arith.constant 286 : index
    %c0_26 = arith.constant 0 : index
    %49 = vector.load %arg1[%c286, %c0_26] : memref<296x128xf32, #tpu.memory_space<vmem>>, vector<1x8xf32>
    %50 = vector.broadcast %49 : vector<1x8xf32> to vector<16x8xf32>
    %51 = arith.addf %48, %50 : vector<16x8xf32>
    %c192 = arith.constant 192 : index
    %c0_27 = arith.constant 0 : index
    %52 = vector.load %arg1[%c192, %c0_27] : memref<296x128xf32, #tpu.memory_space<vmem>>, vector<8x8xf32>
    %cst_28 = arith.constant dense<0.000000e+00> : vector<16x8xf32>
    %53 = tpu.matmul %20, %52, %cst_28 {dimension_numbers = #tpu.dot_dimension_numbers<[1], [0], [0], [1], [0, 0, 1, 1], [], []>} : vector<16x8xf32>, vector<8x8xf32>, vector<16x8xf32> -> vector<16x8xf32>
    %c285 = arith.constant 285 : index
    %c0_29 = arith.constant 0 : index
    %54 = vector.load %arg1[%c285, %c0_29] : memref<296x128xf32, #tpu.memory_space<vmem>>, vector<1x8xf32>
    %55 = vector.broadcast %54 : vector<1x8xf32> to vector<16x8xf32>
    %56 = arith.addf %53, %55 : vector<16x8xf32>
    %57 = arith.mulf %33, %51 : vector<16x8xf32>
    %58 = arith.addf %56, %57 : vector<16x8xf32>
    %59 = math.tanh %58 : vector<16x8xf32>
    %cst_30 = arith.constant 1.000000e+00 : f32
    %60 = vector.broadcast %cst_30 : f32 to vector<16x8xf32>
    %61 = arith.subf %60, %46 : vector<16x8xf32>
    %62 = arith.mulf %61, %59 : vector<16x8xf32>
    %63 = arith.mulf %46, %1 : vector<16x8xf32>
    %64 = arith.addf %62, %63 : vector<16x8xf32>
    %c224 = arith.constant 224 : index
    %c0_31 = arith.constant 0 : index
    %65 = vector.load %arg1[%c224, %c0_31] : memref<296x128xf32, #tpu.memory_space<vmem>>, vector<8x16xf32>
    %cst_32 = arith.constant dense<0.000000e+00> : vector<16x16xf32>
    %66 = tpu.matmul %64, %65, %cst_32 {dimension_numbers = #tpu.dot_dimension_numbers<[1], [0], [0], [1], [0, 0, 1, 1], [], []>} : vector<16x8xf32>, vector<8x16xf32>, vector<16x16xf32> -> vector<16x16xf32>
    %c287 = arith.constant 287 : index
    %c0_33 = arith.constant 0 : index
    %67 = vector.load %arg1[%c287, %c0_33] : memref<296x128xf32, #tpu.memory_space<vmem>>, vector<1x16xf32>
    %68 = vector.broadcast %67 : vector<1x16xf32> to vector<16x16xf32>
    %69 = arith.addf %66, %68 : vector<16x16xf32>
    %cst_34 = arith.constant 0.000000e+00 : f32
    %70 = vector.broadcast %cst_34 : f32 to vector<16x16xf32>
    %71 = arith.maximumf %69, %70 : vector<16x16xf32>
    %c232 = arith.constant 232 : index
    %c0_35 = arith.constant 0 : index
    %72 = vector.load %arg1[%c232, %c0_35] : memref<296x128xf32, #tpu.memory_space<vmem>>, vector<16x32xf32>
    %cst_36 = arith.constant dense<0.000000e+00> : vector<16x32xf32>
    %73 = tpu.matmul %71, %72, %cst_36 {dimension_numbers = #tpu.dot_dimension_numbers<[1], [0], [0], [1], [0, 0, 1, 1], [], []>} : vector<16x16xf32>, vector<16x32xf32>, vector<16x32xf32> -> vector<16x32xf32>
    %c288 = arith.constant 288 : index
    %c0_37 = arith.constant 0 : index
    %74 = vector.load %arg1[%c288, %c0_37] : memref<296x128xf32, #tpu.memory_space<vmem>>, vector<1x32xf32>
    %75 = vector.broadcast %74 : vector<1x32xf32> to vector<16x32xf32>
    %76 = arith.addf %73, %75 : vector<16x32xf32>
    %cst_38 = arith.constant 0.000000e+00 : f32
    %77 = vector.broadcast %cst_38 : f32 to vector<16x32xf32>
    %78 = arith.maximumf %76, %77 : vector<16x32xf32>
    %c248 = arith.constant 248 : index
    %c0_39 = arith.constant 0 : index
    %79 = vector.load %arg1[%c248, %c0_39] : memref<296x128xf32, #tpu.memory_space<vmem>>, vector<32x64xf32>
    %cst_40 = arith.constant dense<0.000000e+00> : vector<16x64xf32>
    %80 = tpu.matmul %78, %79, %cst_40 {dimension_numbers = #tpu.dot_dimension_numbers<[1], [0], [0], [1], [0, 0, 1, 1], [], []>} : vector<16x32xf32>, vector<32x64xf32>, vector<16x64xf32> -> vector<16x64xf32>
    %c289 = arith.constant 289 : index
    %c0_41 = arith.constant 0 : index
    %81 = vector.load %arg1[%c289, %c0_41] : memref<296x128xf32, #tpu.memory_space<vmem>>, vector<1x64xf32>
    %82 = vector.broadcast %81 : vector<1x64xf32> to vector<16x64xf32>
    %83 = arith.addf %80, %82 : vector<16x64xf32>
    %c0_42 = arith.constant 0 : index
    %c0_43 = arith.constant 0 : index
    %84 = vector.load %arg2[%c0_42, %c0_43] : memref<16x8xf32, #tpu.memory_space<vmem>>, vector<16x8xf32>
    tpu.vector_store %arg2[%c0_42, %c0_43], %64 {strides = array<i32>} : memref<16x8xf32, #tpu.memory_space<vmem>>, vector<16x8xf32>,
    %c0_44 = arith.constant 0 : index
    %c0_45 = arith.constant 0 : index
    %85 = vector.load %arg3[%c0_44, %c0_45] : memref<16x64xf32, #tpu.memory_space<vmem>>, vector<16x64xf32>
    tpu.vector_store %arg3[%c0_44, %c0_45], %83 {strides = array<i32>} : memref<16x64xf32, #tpu.memory_space<vmem>>, vector<16x64xf32>,
    return
  }
}

</mosaic_0001>

<llo_original>
// kernel: tpu_custom_call.1
$region0: #{tpu_custom_call.1}
  #allocation0 [shape = 'u32[]', space=smem, size = 0x4, offset = 0x4, fixed_abs, tag = 'smem constant byte address 0x4 - core index']
  #allocation1 [shape = 'u32[144,128]{1,0:T(1,128)}', space=vmem, size = 0x12000, scoped, tag = 'internal scratch']
  %s0 = inlined_call_operand.hbm [shape: f32[16,128], index: 0, kind: input, shape index: {}]
  %s1 = inlined_call_operand.hbm [shape: f32[296,128], index: 1, kind: input, shape index: {}]
  %s2 = inlined_call_operand.vmem [shape: f32[16,8], index: 2, kind: output, shape index: {0}]
  %s3 = inlined_call_operand.hbm [shape: f32[16,64], index: 3, kind: output, shape index: {1}]
  %4 = xla_tuple %s2, %s3
  %s5 = sld [smem:[#allocation0]]
  $region34: #{tpu_custom_call.1} parent=0
    _
  %s7 = ssub.s32 1, %s5
  %s8 = scalar_select 0, %s7, %s5
  $region1: #{tpu_custom_call.1} parent=0
    #allocation2 [shape = 'u8[8192]{0}', space=vmem, size = 0x2000, scoped, tag = 'input window, operand 0, single buffered']
    #allocation3 [shape = 's32[1]{0}', space=sflag, size = 0x4, scoped, tag = 'scoped memory for tpu_custom_call.1']
    #allocation4 [shape = 's32[1]{0}', space=sflag, size = 0x4, scoped, tag = 'scoped memory for tpu_custom_call.1']
    #allocation5 [shape = 'u8[151552]{0}', space=vmem, size = 0x25000, scoped, tag = 'input window, operand 1, single buffered']
    #allocation6 [shape = 's32[1]{0}', space=sflag, size = 0x4, scoped, tag = 'scoped memory for tpu_custom_call.1']
    #allocation7 [shape = 'u8[8192]{0}', space=vmem, size = 0x2000, scoped, tag = 'output window, operand 1, single buffered']
    %9 = vsyncpa [#allocation3], 0
    %10 = vsyncpa [#allocation6], 0
    %11 = vsyncpa [#allocation4], 0
    // Predicated region
    $region2: #{tpu_custom_call.1} parent=1 // pred_check
      _
    $region3: #{tpu_custom_call.1} parent=1 // pred_check_branch
      %13 = sbr.rel (0) target = $region5
    $region4: #{tpu_custom_call.1} parent=1 // pred_region
      %s15 = ssub.s32 256, 256
      %16 = vsyncadd [#allocation3], %s15
      %s17 = sshll.u32 [#allocation2], 4
      %s18 = int_to_ptr.vmem [resolvable:$true] %s17
      %23 = dma.hbm_to_vmem [thread:$0]  %s0, 256, %s18, [#allocation3], 128, 128, 8
    $region5: #{tpu_custom_call.1} parent=1 // pred_fallthru
      _
    // Predicated region
    $region6: #{tpu_custom_call.1} parent=1 // pred_check
      _
    $region7: #{tpu_custom_call.1} parent=1 // pred_check_branch
      %25 = sbr.rel (0) target = $region9
    $region8: #{tpu_custom_call.1} parent=1 // pred_region
      %s27 = ssub.s32 4736, 4736
      %28 = vsyncadd [#allocation6], %s27
      %s29 = sshll.u32 [#allocation5], 4
      %s30 = int_to_ptr.vmem [resolvable:$true] %s29
      %35 = dma.hbm_to_vmem [thread:$0]  %s1, 4736, %s30, [#allocation6], 128, 128, 8
    $region9: #{tpu_custom_call.1} parent=1 // pred_fallthru
      _
    // Predicated region
    $region10: #{tpu_custom_call.1} parent=1 // pred_check
      _
    $region11: #{tpu_custom_call.1} parent=1 // pred_check_branch
      %37 = sbr.rel (0) target = $region13
    $region12: #{tpu_custom_call.1} parent=1 // pred_region
      %38 = dma.done [#allocation3], 256
    $region13: #{tpu_custom_call.1} parent=1 // pred_fallthru
      _
    // Predicated region
    $region14: #{tpu_custom_call.1} parent=1 // pred_check
      _
    $region15: #{tpu_custom_call.1} parent=1 // pred_check_branch
      %40 = sbr.rel (0) target = $region17
    $region16: #{tpu_custom_call.1} parent=1 // pred_region
      %41 = dma.done [#allocation6], 4736
    $region17: #{tpu_custom_call.1} parent=1 // pred_fallthru
      _
    %v42 = vld [vmem:[#allocation2] sm:$0xff]
    %v43 = vld [vmem:[#allocation2 + $0x8] sm:$0xff]
    %v44 = vld [vmem:[#allocation5] sm:$0xff]
    %v45 = vld [vmem:[#allocation5 + $0x8] sm:$0xff]
    %v46 = vld [vmem:[#allocation5 + $0x10] sm:$0xff]
    %v47 = vld [vmem:[#allocation5 + $0x18] sm:$0xff]
    %v48 = vld [vmem:[#allocation5 + $0x20] sm:$0xff]
    %v49 = vld [vmem:[#allocation5 + $0x28] sm:$0xff]
    %v50 = vld [vmem:[#allocation5 + $0x30] sm:$0xff]
    %v51 = vld [vmem:[#allocation5 + $0x38] sm:$0xff]
    %v52 = vld [vmem:[#allocation5 + $0x40] sm:$0xff]
    %v53 = vld [vmem:[#allocation5 + $0x48] sm:$0xff]
    %v54 = vld [vmem:[#allocation5 + $0x50] sm:$0xff]
    %v55 = vld [vmem:[#allocation5 + $0x58] sm:$0xff]
    %v56 = vld [vmem:[#allocation5 + $0x60] sm:$0xff]
    %v57 = vld [vmem:[#allocation5 + $0x68] sm:$0xff]
    %v58 = vld [vmem:[#allocation5 + $0x70] sm:$0xff]
    %v59 = vld [vmem:[#allocation5 + $0x78] sm:$0xff]
    %v60 = vld [vmem:[#allocation5 + $0x118] sm:$0x1]
    %v61 = vlaneseq
    %v62 = vshrl.u32 %v61, 7
    %v63 = vsub.s32 0, %v62
    %v64 = vrot.slane %v60, %v63
    %65 = vmatprep.subr.mxu0 0.0
    %66 = vmatpush1.msra.mxu0 %v59
    %67 = vmatprep.subr.mxu0 0.0
    %68 = vmatpush1.msra.mxu0 %v58
    %69 = vmatprep.subr.mxu0 0.0
    %70 = vmatpush1.msra.mxu0 %v57
    %71 = vmatprep.subr.mxu0 0.0
    %72 = vmatpush1.msra.mxu0 %v56
    %73 = vmatprep.subr.mxu0 0.0
    %74 = vmatpush1.msra.mxu0 %v55
    %75 = vmatprep.subr.mxu0 0.0
    %76 = vmatpush1.msra.mxu0 %v54
    %77 = vmatprep.subr.mxu0 0.0
    %78 = vmatpush1.msra.mxu0 %v53
    %79 = vmatprep.subr.mxu0 0.0
    %80 = vmatpush1.msra.mxu0 %v52
    %81 = vmatprep.subr.mxu0 0.0
    %82 = vmatpush1.msra.mxu0 %v51
    %83 = vmatprep.subr.mxu0 0.0
    %84 = vmatpush1.msra.mxu0 %v50
    %85 = vmatprep.subr.mxu0 0.0
    %86 = vmatpush1.msra.mxu0 %v49
    %87 = vmatprep.subr.mxu0 0.0
    %88 = vmatpush1.msra.mxu0 %v48
    %89 = vmatprep.subr.mxu0 0.0
    %90 = vmatpush1.msra.mxu0 %v47
    %91 = vmatprep.subr.mxu0 0.0
    %92 = vmatpush1.msra.mxu0 %v46
    %93 = vmatprep.subr.mxu0 0.0
    %94 = vmatpush1.msra.mxu0 %v45
    %95 = vmatprep.subr.mxu0 0.0
    %96 = vmatpush1.msra.mxu0 %v44
    %97 = vmatprep.subr.mxu0 0.0
    %98 = vmatpush2.msra.mxu0 0.0
    %99 = vmatprep.subr.mxu0 0.0
    %100 = vmatpush2.msra.mxu0 0.0
    %101 = vmatprep.subr.mxu0 0.0
    %102 = vmatpush2.msra.mxu0 0.0
    %103 = vmatprep.subr.mxu0 0.0
    %104 = vmatpush2.msra.mxu0 0.0
    %105 = vmatprep.subr.mxu0 0.0
    %106 = vmatpush2.msra.mxu0 0.0
    %107 = vmatprep.subr.mxu0 0.0
    %108 = vmatpush2.msra.mxu0 0.0
    %109 = vmatprep.subr.mxu0 0.0
    %110 = vmatpush2.msra.mxu0 0.0
    %111 = vmatprep.subr.mxu0 0.0
    %112 = vmatpush2.msra.mxu0 0.0
    %113 = vmatprep.subr.mxu0 0.0
    %114 = vmatpush2.msra.mxu0 0.0
    %115 = vmatprep.subr.mxu0 0.0
    %116 = vmatpush2.msra.mxu0 0.0
    %117 = vmatprep.subr.mxu0 0.0
    %118 = vmatpush2.msra.mxu0 0.0
    %119 = vmatprep.subr.mxu0 0.0
    %120 = vmatpush2.msra.mxu0 0.0
    %121 = vmatprep.subr.mxu0 0.0
    %122 = vmatpush2.msra.mxu0 0.0
    %123 = vmatprep.subr.mxu0 0.0
    %124 = vmatpush2.msra.mxu0 0.0
    %125 = vmatprep.subr.mxu0 0.0
    %126 = vmatpush2.msra.mxu0 0.0
    %127 = vmatprep.subr.mxu0 0.0
    %128 = vmatpush2.msra.mxu0 0.0
    %129 = vmatprep.mubr.f32.mxu0 0.0
    %130 = vmatmul.mubr.f32.gmra.mxu0 %v42
    %v131 = vpop.f32.mrf.mxu0
    %v132 = vadd.f32 %v64, %v131
    %v133 = vpop.f32.mrf.mxu0
    %134 = vmatprep.mubr.f32.mxu0 0.0
    %135 = vmatmul.mubr.f32.gmra.mxu0 %v43
    %v136 = vpop.f32.mrf.mxu0
    %v137 = vadd.f32 %v64, %v136
    %v138 = vpop.f32.mrf.mxu0
    %139 = vdwg.mxu0
    %v140 = vmax.f32 %v132, 0.0
    %v141 = vmax.f32 %v137, 0.0
    %v142 = vld [vmem:[#allocation5 + $0x80] sm:$0xff]
    %v143 = vld [vmem:[#allocation5 + $0x88] sm:$0xff]
    %v144 = vld [vmem:[#allocation5 + $0x90] sm:$0xff]
    %v145 = vld [vmem:[#allocation5 + $0x98] sm:$0xff]
    %v146 = vld [vmem:[#allocation5 + $0x119] sm:$0x1]
    %v147 = vlaneseq
    %v148 = vshrl.u32 %v147, 7
    %v149 = vsub.s32 0, %v148
    %v150 = vrot.slane %v146, %v149
    %vm151 = vcmask 261120
    %v153 = vsel %vm151, %v140, 0
    %v156 = vsel %vm151, %v141, 0
    %158 = vmatprep.subr.mxu0 0.0
    %159 = vmatpush1.msra.mxu0 0.0
    %160 = vmatprep.subr.mxu0 0.0
    %161 = vmatpush1.msra.mxu0 0.0
    %162 = vmatprep.subr.mxu0 0.0
    %163 = vmatpush1.msra.mxu0 0.0
    %164 = vmatprep.subr.mxu0 0.0
    %165 = vmatpush1.msra.mxu0 0.0
    %166 = vmatprep.subr.mxu0 0.0
    %167 = vmatpush1.msra.mxu0 0.0
    %168 = vmatprep.subr.mxu0 0.0
    %169 = vmatpush1.msra.mxu0 0.0
    %170 = vmatprep.subr.mxu0 0.0
    %171 = vmatpush1.msra.mxu0 0.0
    %172 = vmatprep.subr.mxu0 0.0
    %173 = vmatpush1.msra.mxu0 0.0
    %174 = vmatprep.subr.mxu0 0.0
    %175 = vmatpush1.msra.mxu0 0.0
    %176 = vmatprep.subr.mxu0 0.0
    %177 = vmatpush1.msra.mxu0 0.0
    %178 = vmatprep.subr.mxu0 0.0
    %179 = vmatpush1.msra.mxu0 0.0
    %180 = vmatprep.subr.mxu0 0.0
    %181 = vmatpush1.msra.mxu0 0.0
    %182 = vmatprep.subr.mxu0 0.0
    %183 = vmatpush1.msra.mxu0 %v145
    %184 = vmatprep.subr.mxu0 0.0
    %185 = vmatpush1.msra.mxu0 %v144
    %186 = vmatprep.subr.mxu0 0.0
    %187 = vmatpush1.msra.mxu0 %v143
    %188 = vmatprep.subr.mxu0 0.0
    %189 = vmatpush1.msra.mxu0 %v142
    %190 = vmatprep.subr.mxu0 0.0
    %191 = vmatpush2.msra.mxu0 0.0
    %192 = vmatprep.subr.mxu0 0.0
    %193 = vmatpush2.msra.mxu0 0.0
    %194 = vmatprep.subr.mxu0 0.0
    %195 = vmatpush2.msra.mxu0 0.0
    %196 = vmatprep.subr.mxu0 0.0
    %197 = vmatpush2.msra.mxu0 0.0
    %198 = vmatprep.subr.mxu0 0.0
    %199 = vmatpush2.msra.mxu0 0.0
    %200 = vmatprep.subr.mxu0 0.0
    %201 = vmatpush2.msra.mxu0 0.0
    %202 = vmatprep.subr.mxu0 0.0
    %203 = vmatpush2.msra.mxu0 0.0
    %204 = vmatprep.subr.mxu0 0.0
    %205 = vmatpush2.msra.mxu0 0.0
    %206 = vmatprep.subr.mxu0 0.0
    %207 = vmatpush2.msra.mxu0 0.0
    %208 = vmatprep.subr.mxu0 0.0
    %209 = vmatpush2.msra.mxu0 0.0
    %210 = vmatprep.subr.mxu0 0.0
    %211 = vmatpush2.msra.mxu0 0.0
    %212 = vmatprep.subr.mxu0 0.0
    %213 = vmatpush2.msra.mxu0 0.0
    %214 = vmatprep.subr.mxu0 0.0
    %215 = vmatpush2.msra.mxu0 0.0
    %216 = vmatprep.subr.mxu0 0.0
    %217 = vmatpush2.msra.mxu0 0.0
    %218 = vmatprep.subr.mxu0 0.0
    %219 = vmatpush2.msra.mxu0 0.0
    %220 = vmatprep.subr.mxu0 0.0
    %221 = vmatpush2.msra.mxu0 0.0
    %222 = vmatprep.mubr.f32.mxu0 0.0
    %223 = vmatmul.mubr.f32.gmra.mxu0 %v153
    %v224 = vpop.f32.mrf.mxu0
    %v225 = vadd.f32 %v150, %v224
    %v226 = vpop.f32.mrf.mxu0
    %227 = vmatprep.mubr.f32.mxu0 0.0
    %228 = vmatmul.mubr.f32.gmra.mxu0 %v156
    %v229 = vpop.f32.mrf.mxu0
    %v230 = vadd.f32 %v150, %v229
    %v231 = vpop.f32.mrf.mxu0
    %232 = vdwg.mxu0
    %v233 = vmax.f32 %v225, 0.0
    %v234 = vmax.f32 %v230, 0.0
    %v235 = vld [vmem:[#allocation5 + $0xa0] sm:$0xff]
    %v236 = vld [vmem:[#allocation5 + $0xa8] sm:$0xff]
    %v237 = vld [vmem:[#allocation5 + $0x11a] sm:$0x1]
    %v238 = vlaneseq
    %v239 = vshrl.u32 %v238, 7
    %v240 = vsub.s32 0, %v239
    %v241 = vrot.slane %v237, %v240
    %vm242 = vcmask 130048
    %v244 = vsel %vm242, %v233, 0
    %v247 = vsel %vm242, %v234, 0
    %249 = vmatprep.subr.mxu0 0.0
    %250 = vmatpush1.msra.mxu0 0.0
    %251 = vmatprep.subr.mxu0 0.0
    %252 = vmatpush1.msra.mxu0 0.0
    %253 = vmatprep.subr.mxu0 0.0
    %254 = vmatpush1.msra.mxu0 0.0
    %255 = vmatprep.subr.mxu0 0.0
    %256 = vmatpush1.msra.mxu0 0.0
    %257 = vmatprep.subr.mxu0 0.0
    %258 = vmatpush1.msra.mxu0 0.0
    %259 = vmatprep.subr.mxu0 0.0
    %260 = vmatpush1.msra.mxu0 0.0
    %261 = vmatprep.subr.mxu0 0.0
    %262 = vmatpush1.msra.mxu0 0.0
    %263 = vmatprep.subr.mxu0 0.0
    %264 = vmatpush1.msra.mxu0 0.0
    %265 = vmatprep.subr.mxu0 0.0
    %266 = vmatpush1.msra.mxu0 0.0
    %267 = vmatprep.subr.mxu0 0.0
    %268 = vmatpush1.msra.mxu0 0.0
    %269 = vmatprep.subr.mxu0 0.0
    %270 = vmatpush1.msra.mxu0 0.0
    %271 = vmatprep.subr.mxu0 0.0
    %272 = vmatpush1.msra.mxu0 0.0
    %273 = vmatprep.subr.mxu0 0.0
    %274 = vmatpush1.msra.mxu0 0.0
    %275 = vmatprep.subr.mxu0 0.0
    %276 = vmatpush1.msra.mxu0 0.0
    %277 = vmatprep.subr.mxu0 0.0
    %278 = vmatpush1.msra.mxu0 %v236
    %279 = vmatprep.subr.mxu0 0.0
    %280 = vmatpush1.msra.mxu0 %v235
    %281 = vmatprep.subr.mxu0 0.0
    %282 = vmatpush2.msra.mxu0 0.0
    %283 = vmatprep.subr.mxu0 0.0
    %284 = vmatpush2.msra.mxu0 0.0
    %285 = vmatprep.subr.mxu0 0.0
    %286 = vmatpush2.msra.mxu0 0.0
    %287 = vmatprep.subr.mxu0 0.0
    %288 = vmatpush2.msra.mxu0 0.0
    %289 = vmatprep.subr.mxu0 0.0
    %290 = vmatpush2.msra.mxu0 0.0
    %291 = vmatprep.subr.mxu0 0.0
    %292 = vmatpush2.msra.mxu0 0.0
    %293 = vmatprep.subr.mxu0 0.0
    %294 = vmatpush2.msra.mxu0 0.0
    %295 = vmatprep.subr.mxu0 0.0
    %296 = vmatpush2.msra.mxu0 0.0
    %297 = vmatprep.subr.mxu0 0.0
    %298 = vmatpush2.msra.mxu0 0.0
    %299 = vmatprep.subr.mxu0 0.0
    %300 = vmatpush2.msra.mxu0 0.0
    %301 = vmatprep.subr.mxu0 0.0
    %302 = vmatpush2.msra.mxu0 0.0
    %303 = vmatprep.subr.mxu0 0.0
    %304 = vmatpush2.msra.mxu0 0.0
    %305 = vmatprep.subr.mxu0 0.0
    %306 = vmatpush2.msra.mxu0 0.0
    %307 = vmatprep.subr.mxu0 0.0
    %308 = vmatpush2.msra.mxu0 0.0
    %309 = vmatprep.subr.mxu0 0.0
    %310 = vmatpush2.msra.mxu0 0.0
    %311 = vmatprep.subr.mxu0 0.0
    %312 = vmatpush2.msra.mxu0 0.0
    %313 = vmatprep.mubr.f32.mxu0 0.0
    %314 = vmatmul.mubr.f32.gmra.mxu0 %v244
    %v315 = vpop.f32.mrf.mxu0
    %v316 = vadd.f32 %v241, %v315
    %v317 = vpop.f32.mrf.mxu0
    %318 = vmatprep.mubr.f32.mxu0 0.0
    %319 = vmatmul.mubr.f32.gmra.mxu0 %v247
    %v320 = vpop.f32.mrf.mxu0
    %v321 = vadd.f32 %v241, %v320
    %v322 = vpop.f32.mrf.mxu0
    %323 = vdwg.mxu0
    %v324 = vld [vmem:[#allocation5 + $0xb0] sm:$0xff]
    %v325 = vld [vmem:[#allocation5 + $0xc8] sm:$0xff]
    %vm326 = vcmask 64512
    %v328 = vsel %vm326, %v42, 0
    %v331 = vsel %vm326, %v43, 0
    %333 = vmatprep.subr.mxu0 0.0
    %334 = vmatpush1.msra.mxu0 0.0
    %335 = vmatprep.subr.mxu0 0.0
    %336 = vmatpush1.msra.mxu0 0.0
    %337 = vmatprep.subr.mxu0 0.0
    %338 = vmatpush1.msra.mxu0 0.0
    %339 = vmatprep.subr.mxu0 0.0
    %340 = vmatpush1.msra.mxu0 0.0
    %341 = vmatprep.subr.mxu0 0.0
    %342 = vmatpush1.msra.mxu0 0.0
    %343 = vmatprep.subr.mxu0 0.0
    %344 = vmatpush1.msra.mxu0 0.0
    %345 = vmatprep.subr.mxu0 0.0
    %346 = vmatpush1.msra.mxu0 0.0
    %347 = vmatprep.subr.mxu0 0.0
    %348 = vmatpush1.msra.mxu0 0.0
    %349 = vmatprep.subr.mxu0 0.0
    %350 = vmatpush1.msra.mxu0 0.0
    %351 = vmatprep.subr.mxu0 0.0
    %352 = vmatpush1.msra.mxu0 0.0
    %353 = vmatprep.subr.mxu0 0.0
    %354 = vmatpush1.msra.mxu0 0.0
    %355 = vmatprep.subr.mxu0 0.0
    %356 = vmatpush1.msra.mxu0 0.0
    %357 = vmatprep.subr.mxu0 0.0
    %358 = vmatpush1.msra.mxu0 0.0
    %359 = vmatprep.subr.mxu0 0.0
    %360 = vmatpush1.msra.mxu0 0.0
    %361 = vmatprep.subr.mxu0 0.0
    %362 = vmatpush1.msra.mxu0 0.0
    %363 = vmatprep.subr.mxu0 0.0
    %364 = vmatpush1.msra.mxu0 %v325
    %365 = vmatprep.subr.mxu0 0.0
    %366 = vmatpush2.msra.mxu0 0.0
    %367 = vmatprep.subr.mxu0 0.0
    %368 = vmatpush2.msra.mxu0 0.0
    %369 = vmatprep.subr.mxu0 0.0
    %370 = vmatpush2.msra.mxu0 0.0
    %371 = vmatprep.subr.mxu0 0.0
    %372 = vmatpush2.msra.mxu0 0.0
    %373 = vmatprep.subr.mxu0 0.0
    %374 = vmatpush2.msra.mxu0 0.0
    %375 = vmatprep.subr.mxu0 0.0
    %376 = vmatpush2.msra.mxu0 0.0
    %377 = vmatprep.subr.mxu0 0.0
    %378 = vmatpush2.msra.mxu0 0.0
    %379 = vmatprep.subr.mxu0 0.0
    %380 = vmatpush2.msra.mxu0 0.0
    %381 = vmatprep.subr.mxu0 0.0
    %382 = vmatpush2.msra.mxu0 0.0
    %383 = vmatprep.subr.mxu0 0.0
    %384 = vmatpush2.msra.mxu0 0.0
    %385 = vmatprep.subr.mxu0 0.0
    %386 = vmatpush2.msra.mxu0 0.0
    %387 = vmatprep.subr.mxu0 0.0
    %388 = vmatpush2.msra.mxu0 0.0
    %389 = vmatprep.subr.mxu0 0.0
    %390 = vmatpush2.msra.mxu0 0.0
    %391 = vmatprep.subr.mxu0 0.0
    %392 = vmatpush2.msra.mxu0 0.0
    %393 = vmatprep.subr.mxu0 0.0
    %394 = vmatpush2.msra.mxu0 0.0
    %395 = vmatprep.subr.mxu0 0.0
    %396 = vmatpush2.msra.mxu0 0.0
    %397 = vmatprep.mubr.f32.mxu0 0.0
    %398 = vmatmul.mubr.f32.gmra.mxu0 %v328
    %v399 = vpop.f32.mrf.mxu0
    %v400 = vadd.f32 0.0, %v399
    %v401 = vpop.f32.mrf.mxu0
    %402 = vmatprep.mubr.f32.mxu0 0.0
    %403 = vmatmul.mubr.f32.gmra.mxu0 %v331
    %v404 = vpop.f32.mrf.mxu0
    %v405 = vadd.f32 0.0, %v404
    %v406 = vpop.f32.mrf.mxu0
    %407 = vdwg.mxu0
    %v409 = vsel %vm326, %v316, 0
    %v412 = vsel %vm326, %v321, 0
    %414 = vmatprep.subr.mxu0 0.0
    %415 = vmatpush1.msra.mxu0 0.0
    %416 = vmatprep.subr.mxu0 0.0
    %417 = vmatpush1.msra.mxu0 0.0
    %418 = vmatprep.subr.mxu0 0.0
    %419 = vmatpush1.msra.mxu0 0.0
    %420 = vmatprep.subr.mxu0 0.0
    %421 = vmatpush1.msra.mxu0 0.0
    %422 = vmatprep.subr.mxu0 0.0
    %423 = vmatpush1.msra.mxu0 0.0
    %424 = vmatprep.subr.mxu0 0.0
    %425 = vmatpush1.msra.mxu0 0.0
    %426 = vmatprep.subr.mxu0 0.0
    %427 = vmatpush1.msra.mxu0 0.0
    %428 = vmatprep.subr.mxu0 0.0
    %429 = vmatpush1.msra.mxu0 0.0
    %430 = vmatprep.subr.mxu0 0.0
    %431 = vmatpush1.msra.mxu0 0.0
    %432 = vmatprep.subr.mxu0 0.0
    %433 = vmatpush1.msra.mxu0 0.0
    %434 = vmatprep.subr.mxu0 0.0
    %435 = vmatpush1.msra.mxu0 0.0
    %436 = vmatprep.subr.mxu0 0.0
    %437 = vmatpush1.msra.mxu0 0.0
    %438 = vmatprep.subr.mxu0 0.0
    %439 = vmatpush1.msra.mxu0 0.0
    %440 = vmatprep.subr.mxu0 0.0
    %441 = vmatpush1.msra.mxu0 0.0
    %442 = vmatprep.subr.mxu0 0.0
    %443 = vmatpush1.msra.mxu0 0.0
    %444 = vmatprep.subr.mxu0 0.0
    %445 = vmatpush1.msra.mxu0 %v324
    %446 = vmatprep.subr.mxu0 0.0
    %447 = vmatpush2.msra.mxu0 0.0
    %448 = vmatprep.subr.mxu0 0.0
    %449 = vmatpush2.msra.mxu0 0.0
    %450 = vmatprep.subr.mxu0 0.0
    %451 = vmatpush2.msra.mxu0 0.0
    %452 = vmatprep.subr.mxu0 0.0
    %453 = vmatpush2.msra.mxu0 0.0
    %454 = vmatprep.subr.mxu0 0.0
    %455 = vmatpush2.msra.mxu0 0.0
    %456 = vmatprep.subr.mxu0 0.0
    %457 = vmatpush2.msra.mxu0 0.0
    %458 = vmatprep.subr.mxu0 0.0
    %459 = vmatpush2.msra.mxu0 0.0
    %460 = vmatprep.subr.mxu0 0.0
    %461 = vmatpush2.msra.mxu0 0.0
    %462 = vmatprep.subr.mxu0 0.0
    %463 = vmatpush2.msra.mxu0 0.0
    %464 = vmatprep.subr.mxu0 0.0
    %465 = vmatpush2.msra.mxu0 0.0
    %466 = vmatprep.subr.mxu0 0.0
    %467 = vmatpush2.msra.mxu0 0.0
    %468 = vmatprep.subr.mxu0 0.0
    %469 = vmatpush2.msra.mxu0 0.0
    %470 = vmatprep.subr.mxu0 0.0
    %471 = vmatpush2.msra.mxu0 0.0
    %472 = vmatprep.subr.mxu0 0.0
    %473 = vmatpush2.msra.mxu0 0.0
    %474 = vmatprep.subr.mxu0 0.0
    %475 = vmatpush2.msra.mxu0 0.0
    %476 = vmatprep.subr.mxu0 0.0
    %477 = vmatpush2.msra.mxu0 0.0
    %478 = vmatprep.mubr.f32.mxu0 0.0
    %479 = vmatmul.mubr.f32.gmra.mxu0 %v409
    %v480 = vpop.f32.mrf.mxu0
    %v481 = vadd.f32 %v400, %v480
    %v482 = vpop.f32.mrf.mxu0
    %483 = vmatprep.mubr.f32.mxu0 0.0
    %484 = vmatmul.mubr.f32.gmra.mxu0 %v412
    %v485 = vpop.f32.mrf.mxu0
    %v486 = vadd.f32 %v405, %v485
    %v487 = vpop.f32.mrf.mxu0
    %488 = vdwg.mxu0
    %v489 = vld [vmem:[#allocation5 + $0x11b] sm:$0x1]
    %v490 = vlaneseq
    %v491 = vshrl.u32 %v490, 7
    %v492 = vsub.s32 0, %v491
    %v493 = vrot.slane %v489, %v492
    %v494 = vadd.f32 %v481, %v493
    %v495 = vadd.f32 %v486, %v493
    %v496 = vxor.u32 %v494, 2147483648
    %v497 = vxor.u32 %v495, 2147483648
    %v498 = vmul.f32 %v496, 1.442695
    %v499 = vpow.pop %v498
    %v500 = vmul.f32 %v497, 1.442695
    %v501 = vpow.pop %v500
    %v502 = vadd.f32 %v499, 1.0
    %v503 = vadd.f32 %v501, 1.0
    %v504 = vrcp.pop %v502
    %v505 = vmul.f32 1.0, %v504
    %v506 = vrcp.pop %v503
    %v507 = vmul.f32 1.0, %v506
    %v508 = vld [vmem:[#allocation5 + $0xb8] sm:$0xff]
    %v509 = vld [vmem:[#allocation5 + $0xd0] sm:$0xff]
    %510 = vmatprep.subr.mxu0 0.0
    %511 = vmatpush1.msra.mxu0 0.0
    %512 = vmatprep.subr.mxu0 0.0
    %513 = vmatpush1.msra.mxu0 0.0
    %514 = vmatprep.subr.mxu0 0.0
    %515 = vmatpush1.msra.mxu0 0.0
    %516 = vmatprep.subr.mxu0 0.0
    %517 = vmatpush1.msra.mxu0 0.0
    %518 = vmatprep.subr.mxu0 0.0
    %519 = vmatpush1.msra.mxu0 0.0
    %520 = vmatprep.subr.mxu0 0.0
    %521 = vmatpush1.msra.mxu0 0.0
    %522 = vmatprep.subr.mxu0 0.0
    %523 = vmatpush1.msra.mxu0 0.0
    %524 = vmatprep.subr.mxu0 0.0
    %525 = vmatpush1.msra.mxu0 0.0
    %526 = vmatprep.subr.mxu0 0.0
    %527 = vmatpush1.msra.mxu0 0.0
    %528 = vmatprep.subr.mxu0 0.0
    %529 = vmatpush1.msra.mxu0 0.0
    %530 = vmatprep.subr.mxu0 0.0
    %531 = vmatpush1.msra.mxu0 0.0
    %532 = vmatprep.subr.mxu0 0.0
    %533 = vmatpush1.msra.mxu0 0.0
    %534 = vmatprep.subr.mxu0 0.0
    %535 = vmatpush1.msra.mxu0 0.0
    %536 = vmatprep.subr.mxu0 0.0
    %537 = vmatpush1.msra.mxu0 0.0
    %538 = vmatprep.subr.mxu0 0.0
    %539 = vmatpush1.msra.mxu0 0.0
    %540 = vmatprep.subr.mxu0 0.0
    %541 = vmatpush1.msra.mxu0 %v509
    %542 = vmatprep.subr.mxu0 0.0
    %543 = vmatpush2.msra.mxu0 0.0
    %544 = vmatprep.subr.mxu0 0.0
    %545 = vmatpush2.msra.mxu0 0.0
    %546 = vmatprep.subr.mxu0 0.0
    %547 = vmatpush2.msra.mxu0 0.0
    %548 = vmatprep.subr.mxu0 0.0
    %549 = vmatpush2.msra.mxu0 0.0
    %550 = vmatprep.subr.mxu0 0.0
    %551 = vmatpush2.msra.mxu0 0.0
    %552 = vmatprep.subr.mxu0 0.0
    %553 = vmatpush2.msra.mxu0 0.0
    %554 = vmatprep.subr.mxu0 0.0
    %555 = vmatpush2.msra.mxu0 0.0
    %556 = vmatprep.subr.mxu0 0.0
    %557 = vmatpush2.msra.mxu0 0.0
    %558 = vmatprep.subr.mxu0 0.0
    %559 = vmatpush2.msra.mxu0 0.0
    %560 = vmatprep.subr.mxu0 0.0
    %561 = vmatpush2.msra.mxu0 0.0
    %562 = vmatprep.subr.mxu0 0.0
    %563 = vmatpush2.msra.mxu0 0.0
    %564 = vmatprep.subr.mxu0 0.0
    %565 = vmatpush2.msra.mxu0 0.0
    %566 = vmatprep.subr.mxu0 0.0
    %567 = vmatpush2.msra.mxu0 0.0
    %568 = vmatprep.subr.mxu0 0.0
    %569 = vmatpush2.msra.mxu0 0.0
    %570 = vmatprep.subr.mxu0 0.0
    %571 = vmatpush2.msra.mxu0 0.0
    %572 = vmatprep.subr.mxu0 0.0
    %573 = vmatpush2.msra.mxu0 0.0
    %574 = vmatprep.mubr.f32.mxu0 0.0
    %575 = vmatmul.mubr.f32.gmra.mxu0 %v328
    %v576 = vpop.f32.mrf.mxu0
    %v577 = vadd.f32 0.0, %v576
    %v578 = vpop.f32.mrf.mxu0
    %579 = vmatprep.mubr.f32.mxu0 0.0
    %580 = vmatmul.mubr.f32.gmra.mxu0 %v331
    %v581 = vpop.f32.mrf.mxu0
    %v582 = vadd.f32 0.0, %v581
    %v583 = vpop.f32.mrf.mxu0
    %584 = vdwg.mxu0
    %585 = vmatprep.subr.mxu0 0.0
    %586 = vmatpush1.msra.mxu0 0.0
    %587 = vmatprep.subr.mxu0 0.0
    %588 = vmatpush1.msra.mxu0 0.0
    %589 = vmatprep.subr.mxu0 0.0
    %590 = vmatpush1.msra.mxu0 0.0
    %591 = vmatprep.subr.mxu0 0.0
    %592 = vmatpush1.msra.mxu0 0.0
    %593 = vmatprep.subr.mxu0 0.0
    %594 = vmatpush1.msra.mxu0 0.0
    %595 = vmatprep.subr.mxu0 0.0
    %596 = vmatpush1.msra.mxu0 0.0
    %597 = vmatprep.subr.mxu0 0.0
    %598 = vmatpush1.msra.mxu0 0.0
    %599 = vmatprep.subr.mxu0 0.0
    %600 = vmatpush1.msra.mxu0 0.0
    %601 = vmatprep.subr.mxu0 0.0
    %602 = vmatpush1.msra.mxu0 0.0
    %603 = vmatprep.subr.mxu0 0.0
    %604 = vmatpush1.msra.mxu0 0.0
    %605 = vmatprep.subr.mxu0 0.0
    %606 = vmatpush1.msra.mxu0 0.0
    %607 = vmatprep.subr.mxu0 0.0
    %608 = vmatpush1.msra.mxu0 0.0
    %609 = vmatprep.subr.mxu0 0.0
    %610 = vmatpush1.msra.mxu0 0.0
    %611 = vmatprep.subr.mxu0 0.0
    %612 = vmatpush1.msra.mxu0 0.0
    %613 = vmatprep.subr.mxu0 0.0
    %614 = vmatpush1.msra.mxu0 0.0
    %615 = vmatprep.subr.mxu0 0.0
    %616 = vmatpush1.msra.mxu0 %v508
    %617 = vmatprep.subr.mxu0 0.0
    %618 = vmatpush2.msra.mxu0 0.0
    %619 = vmatprep.subr.mxu0 0.0
    %620 = vmatpush2.msra.mxu0 0.0
    %621 = vmatprep.subr.mxu0 0.0
    %622 = vmatpush2.msra.mxu0 0.0
    %623 = vmatprep.subr.mxu0 0.0
    %624 = vmatpush2.msra.mxu0 0.0
    %625 = vmatprep.subr.mxu0 0.0
    %626 = vmatpush2.msra.mxu0 0.0
    %627 = vmatprep.subr.mxu0 0.0
    %628 = vmatpush2.msra.mxu0 0.0
    %629 = vmatprep.subr.mxu0 0.0
    %630 = vmatpush2.msra.mxu0 0.0
    %631 = vmatprep.subr.mxu0 0.0
    %632 = vmatpush2.msra.mxu0 0.0
    %633 = vmatprep.subr.mxu0 0.0
    %634 = vmatpush2.msra.mxu0 0.0
    %635 = vmatprep.subr.mxu0 0.0
    %636 = vmatpush2.msra.mxu0 0.0
    %637 = vmatprep.subr.mxu0 0.0
    %638 = vmatpush2.msra.mxu0 0.0
    %639 = vmatprep.subr.mxu0 0.0
    %640 = vmatpush2.msra.mxu0 0.0
    %641 = vmatprep.subr.mxu0 0.0
    %642 = vmatpush2.msra.mxu0 0.0
    %643 = vmatprep.subr.mxu0 0.0
    %644 = vmatpush2.msra.mxu0 0.0
    %645 = vmatprep.subr.mxu0 0.0
    %646 = vmatpush2.msra.mxu0 0.0
    %647 = vmatprep.subr.mxu0 0.0
    %648 = vmatpush2.msra.mxu0 0.0
    %649 = vmatprep.mubr.f32.mxu0 0.0
    %650 = vmatmul.mubr.f32.gmra.mxu0 %v409
    %v651 = vpop.f32.mrf.mxu0
    %v652 = vadd.f32 %v577, %v651
    %v653 = vpop.f32.mrf.mxu0
    %654 = vmatprep.mubr.f32.mxu0 0.0
    %655 = vmatmul.mubr.f32.gmra.mxu0 %v412
    %v656 = vpop.f32.mrf.mxu0
    %v657 = vadd.f32 %v582, %v656
    %v658 = vpop.f32.mrf.mxu0
    %659 = vdwg.mxu0
    %v660 = vld [vmem:[#allocation5 + $0x11c] sm:$0x1]
    %v661 = vlaneseq
    %v662 = vshrl.u32 %v661, 7
    %v663 = vsub.s32 0, %v662
    %v664 = vrot.slane %v660, %v663
    %v665 = vadd.f32 %v652, %v664
    %v666 = vadd.f32 %v657, %v664
    %v667 = vxor.u32 %v665, 2147483648
    %v668 = vxor.u32 %v666, 2147483648
    %v669 = vmul.f32 %v667, 1.442695
    %v670 = vpow.pop %v669
    %v671 = vmul.f32 %v668, 1.442695
    %v672 = vpow.pop %v671
    %v673 = vadd.f32 %v670, 1.0
    %v674 = vadd.f32 %v672, 1.0
    %v675 = vrcp.pop %v673
    %v676 = vmul.f32 1.0, %v675
    %v677 = vrcp.pop %v674
    %v678 = vmul.f32 1.0, %v677
    %v679 = vld [vmem:[#allocation5 + $0xd8] sm:$0xff]
    %v680 = vld [vmem:[#allocation5 + $0x11e] sm:$0x1]
    %v681 = vlaneseq
    %v682 = vshrl.u32 %v681, 7
    %v683 = vsub.s32 0, %v682
    %v684 = vrot.slane %v680, %v683
    %685 = vmatprep.subr.mxu0 0.0
    %686 = vmatpush1.msra.mxu0 0.0
    %687 = vmatprep.subr.mxu0 0.0
    %688 = vmatpush1.msra.mxu0 0.0
    %689 = vmatprep.subr.mxu0 0.0
    %690 = vmatpush1.msra.mxu0 0.0
    %691 = vmatprep.subr.mxu0 0.0
    %692 = vmatpush1.msra.mxu0 0.0
    %693 = vmatprep.subr.mxu0 0.0
    %694 = vmatpush1.msra.mxu0 0.0
    %695 = vmatprep.subr.mxu0 0.0
    %696 = vmatpush1.msra.mxu0 0.0
    %697 = vmatprep.subr.mxu0 0.0
    %698 = vmatpush1.msra.mxu0 0.0
    %699 = vmatprep.subr.mxu0 0.0
    %700 = vmatpush1.msra.mxu0 0.0
    %701 = vmatprep.subr.mxu0 0.0
    %702 = vmatpush1.msra.mxu0 0.0
    %703 = vmatprep.subr.mxu0 0.0
    %704 = vmatpush1.msra.mxu0 0.0
    %705 = vmatprep.subr.mxu0 0.0
    %706 = vmatpush1.msra.mxu0 0.0
    %707 = vmatprep.subr.mxu0 0.0
    %708 = vmatpush1.msra.mxu0 0.0
    %709 = vmatprep.subr.mxu0 0.0
    %710 = vmatpush1.msra.mxu0 0.0
    %711 = vmatprep.subr.mxu0 0.0
    %712 = vmatpush1.msra.mxu0 0.0
    %713 = vmatprep.subr.mxu0 0.0
    %714 = vmatpush1.msra.mxu0 0.0
    %715 = vmatprep.subr.mxu0 0.0
    %716 = vmatpush1.msra.mxu0 %v679
    %717 = vmatprep.subr.mxu0 0.0
    %718 = vmatpush2.msra.mxu0 0.0
    %719 = vmatprep.subr.mxu0 0.0
    %720 = vmatpush2.msra.mxu0 0.0
    %721 = vmatprep.subr.mxu0 0.0
    %722 = vmatpush2.msra.mxu0 0.0
    %723 = vmatprep.subr.mxu0 0.0
    %724 = vmatpush2.msra.mxu0 0.0
    %725 = vmatprep.subr.mxu0 0.0
    %726 = vmatpush2.msra.mxu0 0.0
    %727 = vmatprep.subr.mxu0 0.0
    %728 = vmatpush2.msra.mxu0 0.0
    %729 = vmatprep.subr.mxu0 0.0
    %730 = vmatpush2.msra.mxu0 0.0
    %731 = vmatprep.subr.mxu0 0.0
    %732 = vmatpush2.msra.mxu0 0.0
    %733 = vmatprep.subr.mxu0 0.0
    %734 = vmatpush2.msra.mxu0 0.0
    %735 = vmatprep.subr.mxu0 0.0
    %736 = vmatpush2.msra.mxu0 0.0
    %737 = vmatprep.subr.mxu0 0.0
    %738 = vmatpush2.msra.mxu0 0.0
    %739 = vmatprep.subr.mxu0 0.0
    %740 = vmatpush2.msra.mxu0 0.0
    %741 = vmatprep.subr.mxu0 0.0
    %742 = vmatpush2.msra.mxu0 0.0
    %743 = vmatprep.subr.mxu0 0.0
    %744 = vmatpush2.msra.mxu0 0.0
    %745 = vmatprep.subr.mxu0 0.0
    %746 = vmatpush2.msra.mxu0 0.0
    %747 = vmatprep.subr.mxu0 0.0
    %748 = vmatpush2.msra.mxu0 0.0
    %749 = vmatprep.mubr.f32.mxu0 0.0
    %750 = vmatmul.mubr.f32.gmra.mxu0 %v328
    %v751 = vpop.f32.mrf.mxu0
    %v752 = vadd.f32 %v684, %v751
    %v753 = vpop.f32.mrf.mxu0
    %754 = vmatprep.mubr.f32.mxu0 0.0
    %755 = vmatmul.mubr.f32.gmra.mxu0 %v331
    %v756 = vpop.f32.mrf.mxu0
    %v757 = vadd.f32 %v684, %v756
    %v758 = vpop.f32.mrf.mxu0
    %759 = vdwg.mxu0
    %v760 = vld [vmem:[#allocation5 + $0xc0] sm:$0xff]
    %v761 = vld [vmem:[#allocation5 + $0x11d] sm:$0x1]
    %v762 = vlaneseq
    %v763 = vshrl.u32 %v762, 7
    %v764 = vsub.s32 0, %v763
    %v765 = vrot.slane %v761, %v764
    %766 = vmatprep.subr.mxu0 0.0
    %767 = vmatpush1.msra.mxu0 0.0
    %768 = vmatprep.subr.mxu0 0.0
    %769 = vmatpush1.msra.mxu0 0.0
    %770 = vmatprep.subr.mxu0 0.0
    %771 = vmatpush1.msra.mxu0 0.0
    %772 = vmatprep.subr.mxu0 0.0
    %773 = vmatpush1.msra.mxu0 0.0
    %774 = vmatprep.subr.mxu0 0.0
    %775 = vmatpush1.msra.mxu0 0.0
    %776 = vmatprep.subr.mxu0 0.0
    %777 = vmatpush1.msra.mxu0 0.0
    %778 = vmatprep.subr.mxu0 0.0
    %779 = vmatpush1.msra.mxu0 0.0
    %780 = vmatprep.subr.mxu0 0.0
    %781 = vmatpush1.msra.mxu0 0.0
    %782 = vmatprep.subr.mxu0 0.0
    %783 = vmatpush1.msra.mxu0 0.0
    %784 = vmatprep.subr.mxu0 0.0
    %785 = vmatpush1.msra.mxu0 0.0
    %786 = vmatprep.subr.mxu0 0.0
    %787 = vmatpush1.msra.mxu0 0.0
    %788 = vmatprep.subr.mxu0 0.0
    %789 = vmatpush1.msra.mxu0 0.0
    %790 = vmatprep.subr.mxu0 0.0
    %791 = vmatpush1.msra.mxu0 0.0
    %792 = vmatprep.subr.mxu0 0.0
    %793 = vmatpush1.msra.mxu0 0.0
    %794 = vmatprep.subr.mxu0 0.0
    %795 = vmatpush1.msra.mxu0 0.0
    %796 = vmatprep.subr.mxu0 0.0
    %797 = vmatpush1.msra.mxu0 %v760
    %798 = vmatprep.subr.mxu0 0.0
    %799 = vmatpush2.msra.mxu0 0.0
    %800 = vmatprep.subr.mxu0 0.0
    %801 = vmatpush2.msra.mxu0 0.0
    %802 = vmatprep.subr.mxu0 0.0
    %803 = vmatpush2.msra.mxu0 0.0
    %804 = vmatprep.subr.mxu0 0.0
    %805 = vmatpush2.msra.mxu0 0.0
    %806 = vmatprep.subr.mxu0 0.0
    %807 = vmatpush2.msra.mxu0 0.0
    %808 = vmatprep.subr.mxu0 0.0
    %809 = vmatpush2.msra.mxu0 0.0
    %810 = vmatprep.subr.mxu0 0.0
    %811 = vmatpush2.msra.mxu0 0.0
    %812 = vmatprep.subr.mxu0 0.0
    %813 = vmatpush2.msra.mxu0 0.0
    %814 = vmatprep.subr.mxu0 0.0
    %815 = vmatpush2.msra.mxu0 0.0
    %816 = vmatprep.subr.mxu0 0.0
    %817 = vmatpush2.msra.mxu0 0.0
    %818 = vmatprep.subr.mxu0 0.0
    %819 = vmatpush2.msra.mxu0 0.0
    %820 = vmatprep.subr.mxu0 0.0
    %821 = vmatpush2.msra.mxu0 0.0
    %822 = vmatprep.subr.mxu0 0.0
    %823 = vmatpush2.msra.mxu0 0.0
    %824 = vmatprep.subr.mxu0 0.0
    %825 = vmatpush2.msra.mxu0 0.0
    %826 = vmatprep.subr.mxu0 0.0
    %827 = vmatpush2.msra.mxu0 0.0
    %828 = vmatprep.subr.mxu0 0.0
    %829 = vmatpush2.msra.mxu0 0.0
    %830 = vmatprep.mubr.f32.mxu0 0.0
    %831 = vmatmul.mubr.f32.gmra.mxu0 %v409
    %v832 = vpop.f32.mrf.mxu0
    %v833 = vadd.f32 %v765, %v832
    %v834 = vpop.f32.mrf.mxu0
    %835 = vmatprep.mubr.f32.mxu0 0.0
    %836 = vmatmul.mubr.f32.gmra.mxu0 %v412
    %v837 = vpop.f32.mrf.mxu0
    %v838 = vadd.f32 %v765, %v837
    %v839 = vpop.f32.mrf.mxu0
    %840 = vdwg.mxu0
    %v841 = vmul.f32 %v505, %v752
    %v842 = vmul.f32 %v507, %v757
    %v843 = vadd.f32 %v833, %v841
    %v844 = vadd.f32 %v838, %v842
    %v845 = vtanh.pop %v843
    %v846 = vtanh.pop %v844
    %v847 = vsub.f32 1.0, %v676
    %v848 = vsub.f32 1.0, %v678
    %v849 = vmul.f32 %v847, %v845
    %v850 = vmul.f32 %v848, %v846
    %v851 = vmul.f32 %v676, %v42
    %v852 = vmul.f32 %v678, %v43
    %v853 = vadd.f32 %v849, %v851
    %v854 = vadd.f32 %v850, %v852
    %v855 = vld [vmem:[#allocation5 + $0xe0] sm:$0xff]
    %v856 = vld [vmem:[#allocation5 + $0x11f] sm:$0x1]
    %v857 = vlaneseq
    %v858 = vshrl.u32 %v857, 7
    %v859 = vsub.s32 0, %v858
    %v860 = vrot.slane %v856, %v859
    %v862 = vsel %vm326, %v853, 0
    %v865 = vsel %vm326, %v854, 0
    %867 = vmatprep.subr.mxu0 0.0
    %868 = vmatpush1.msra.mxu0 0.0
    %869 = vmatprep.subr.mxu0 0.0
    %870 = vmatpush1.msra.mxu0 0.0
    %871 = vmatprep.subr.mxu0 0.0
    %872 = vmatpush1.msra.mxu0 0.0
    %873 = vmatprep.subr.mxu0 0.0
    %874 = vmatpush1.msra.mxu0 0.0
    %875 = vmatprep.subr.mxu0 0.0
    %876 = vmatpush1.msra.mxu0 0.0
    %877 = vmatprep.subr.mxu0 0.0
    %878 = vmatpush1.msra.mxu0 0.0
    %879 = vmatprep.subr.mxu0 0.0
    %880 = vmatpush1.msra.mxu0 0.0
    %881 = vmatprep.subr.mxu0 0.0
    %882 = vmatpush1.msra.mxu0 0.0
    %883 = vmatprep.subr.mxu0 0.0
    %884 = vmatpush1.msra.mxu0 0.0
    %885 = vmatprep.subr.mxu0 0.0
    %886 = vmatpush1.msra.mxu0 0.0
    %887 = vmatprep.subr.mxu0 0.0
    %888 = vmatpush1.msra.mxu0 0.0
    %889 = vmatprep.subr.mxu0 0.0
    %890 = vmatpush1.msra.mxu0 0.0
    %891 = vmatprep.subr.mxu0 0.0
    %892 = vmatpush1.msra.mxu0 0.0
    %893 = vmatprep.subr.mxu0 0.0
    %894 = vmatpush1.msra.mxu0 0.0
    %895 = vmatprep.subr.mxu0 0.0
    %896 = vmatpush1.msra.mxu0 0.0
    %897 = vmatprep.subr.mxu0 0.0
    %898 = vmatpush1.msra.mxu0 %v855
    %899 = vmatprep.subr.mxu0 0.0
    %900 = vmatpush2.msra.mxu0 0.0
    %901 = vmatprep.subr.mxu0 0.0
    %902 = vmatpush2.msra.mxu0 0.0
    %903 = vmatprep.subr.mxu0 0.0
    %904 = vmatpush2.msra.mxu0 0.0
    %905 = vmatprep.subr.mxu0 0.0
    %906 = vmatpush2.msra.mxu0 0.0
    %907 = vmatprep.subr.mxu0 0.0
    %908 = vmatpush2.msra.mxu0 0.0
    %909 = vmatprep.subr.mxu0 0.0
    %910 = vmatpush2.msra.mxu0 0.0
    %911 = vmatprep.subr.mxu0 0.0
    %912 = vmatpush2.msra.mxu0 0.0
    %913 = vmatprep.subr.mxu0 0.0
    %914 = vmatpush2.msra.mxu0 0.0
    %915 = vmatprep.subr.mxu0 0.0
    %916 = vmatpush2.msra.mxu0 0.0
    %917 = vmatprep.subr.mxu0 0.0
    %918 = vmatpush2.msra.mxu0 0.0
    %919 = vmatprep.subr.mxu0 0.0
    %920 = vmatpush2.msra.mxu0 0.0
    %921 = vmatprep.subr.mxu0 0.0
    %922 = vmatpush2.msra.mxu0 0.0
    %923 = vmatprep.subr.mxu0 0.0
    %924 = vmatpush2.msra.mxu0 0.0
    %925 = vmatprep.subr.mxu0 0.0
    %926 = vmatpush2.msra.mxu0 0.0
    %927 = vmatprep.subr.mxu0 0.0
    %928 = vmatpush2.msra.mxu0 0.0
    %929 = vmatprep.subr.mxu0 0.0
    %930 = vmatpush2.msra.mxu0 0.0
    %931 = vmatprep.mubr.f32.mxu0 0.0
    %932 = vmatmul.mubr.f32.gmra.mxu0 %v862
    %v933 = vpop.f32.mrf.mxu0
    %v934 = vadd.f32 %v860, %v933
    %v935 = vpop.f32.mrf.mxu0
    %936 = vmatprep.mubr.f32.mxu0 0.0
    %937 = vmatmul.mubr.f32.gmra.mxu0 %v865
    %v938 = vpop.f32.mrf.mxu0
    %v939 = vadd.f32 %v860, %v938
    %v940 = vpop.f32.mrf.mxu0
    %941 = vdwg.mxu0
    %v942 = vmax.f32 %v934, 0.0
    %v943 = vmax.f32 %v939, 0.0
    %v944 = vld [vmem:[#allocation5 + $0xe8] sm:$0xff]
    %v945 = vld [vmem:[#allocation5 + $0xf0] sm:$0xff]
    %v946 = vld [vmem:[#allocation5 + $0x120] sm:$0x1]
    %v947 = vlaneseq
    %v948 = vshrl.u32 %v947, 7
    %v949 = vsub.s32 0, %v948
    %v950 = vrot.slane %v946, %v949
    %v952 = vsel %vm242, %v942, 0
    %v955 = vsel %vm242, %v943, 0
    %957 = vmatprep.subr.mxu0 0.0
    %958 = vmatpush1.msra.mxu0 0.0
    %959 = vmatprep.subr.mxu0 0.0
    %960 = vmatpush1.msra.mxu0 0.0
    %961 = vmatprep.subr.mxu0 0.0
    %962 = vmatpush1.msra.mxu0 0.0
    %963 = vmatprep.subr.mxu0 0.0
    %964 = vmatpush1.msra.mxu0 0.0
    %965 = vmatprep.subr.mxu0 0.0
    %966 = vmatpush1.msra.mxu0 0.0
    %967 = vmatprep.subr.mxu0 0.0
    %968 = vmatpush1.msra.mxu0 0.0
    %969 = vmatprep.subr.mxu0 0.0
    %970 = vmatpush1.msra.mxu0 0.0
    %971 = vmatprep.subr.mxu0 0.0
    %972 = vmatpush1.msra.mxu0 0.0
    %973 = vmatprep.subr.mxu0 0.0
    %974 = vmatpush1.msra.mxu0 0.0
    %975 = vmatprep.subr.mxu0 0.0
    %976 = vmatpush1.msra.mxu0 0.0
    %977 = vmatprep.subr.mxu0 0.0
    %978 = vmatpush1.msra.mxu0 0.0
    %979 = vmatprep.subr.mxu0 0.0
    %980 = vmatpush1.msra.mxu0 0.0
    %981 = vmatprep.subr.mxu0 0.0
    %982 = vmatpush1.msra.mxu0 0.0
    %983 = vmatprep.subr.mxu0 0.0
    %984 = vmatpush1.msra.mxu0 0.0
    %985 = vmatprep.subr.mxu0 0.0
    %986 = vmatpush1.msra.mxu0 %v945
    %987 = vmatprep.subr.mxu0 0.0
    %988 = vmatpush1.msra.mxu0 %v944
    %989 = vmatprep.subr.mxu0 0.0
    %990 = vmatpush2.msra.mxu0 0.0
    %991 = vmatprep.subr.mxu0 0.0
    %992 = vmatpush2.msra.mxu0 0.0
    %993 = vmatprep.subr.mxu0 0.0
    %994 = vmatpush2.msra.mxu0 0.0
    %995 = vmatprep.subr.mxu0 0.0
    %996 = vmatpush2.msra.mxu0 0.0
    %997 = vmatprep.subr.mxu0 0.0
    %998 = vmatpush2.msra.mxu0 0.0
    %999 = vmatprep.subr.mxu0 0.0
    %1000 = vmatpush2.msra.mxu0 0.0
    %1001 = vmatprep.subr.mxu0 0.0
    %1002 = vmatpush2.msra.mxu0 0.0
    %1003 = vmatprep.subr.mxu0 0.0
    %1004 = vmatpush2.msra.mxu0 0.0
    %1005 = vmatprep.subr.mxu0 0.0
    %1006 = vmatpush2.msra.mxu0 0.0
    %1007 = vmatprep.subr.mxu0 0.0
    %1008 = vmatpush2.msra.mxu0 0.0
    %1009 = vmatprep.subr.mxu0 0.0
    %1010 = vmatpush2.msra.mxu0 0.0
    %1011 = vmatprep.subr.mxu0 0.0
    %1012 = vmatpush2.msra.mxu0 0.0
    %1013 = vmatprep.subr.mxu0 0.0
    %1014 = vmatpush2.msra.mxu0 0.0
    %1015 = vmatprep.subr.mxu0 0.0
    %1016 = vmatpush2.msra.mxu0 0.0
    %1017 = vmatprep.subr.mxu0 0.0
    %1018 = vmatpush2.msra.mxu0 0.0
    %1019 = vmatprep.subr.mxu0 0.0
    %1020 = vmatpush2.msra.mxu0 0.0
    %1021 = vmatprep.mubr.f32.mxu0 0.0
    %1022 = vmatmul.mubr.f32.gmra.mxu0 %v952
    %v1023 = vpop.f32.mrf.mxu0
    %v1024 = vadd.f32 %v950, %v1023
    %v1025 = vpop.f32.mrf.mxu0
    %1026 = vmatprep.mubr.f32.mxu0 0.0
    %1027 = vmatmul.mubr.f32.gmra.mxu0 %v955
    %v1028 = vpop.f32.mrf.mxu0
    %v1029 = vadd.f32 %v950, %v1028
    %v1030 = vpop.f32.mrf.mxu0
    %1031 = vdwg.mxu0
    %v1032 = vmax.f32 %v1024, 0.0
    %v1033 = vmax.f32 %v1029, 0.0
    %v1034 = vld [vmem:[#allocation5 + $0xf8] sm:$0xff]
    %v1035 = vld [vmem:[#allocation5 + $0x100] sm:$0xff]
    %v1036 = vld [vmem:[#allocation5 + $0x108] sm:$0xff]
    %v1037 = vld [vmem:[#allocation5 + $0x110] sm:$0xff]
    %v1038 = vld [vmem:[#allocation5 + $0x121] sm:$0x1]
    %v1039 = vlaneseq
    %v1040 = vshrl.u32 %v1039, 7
    %v1041 = vsub.s32 0, %v1040
    %v1042 = vrot.slane %v1038, %v1041
    %v1044 = vsel %vm151, %v1032, 0
    %v1047 = vsel %vm151, %v1033, 0
    %1049 = vmatprep.subr.mxu0 0.0
    %1050 = vmatpush1.msra.mxu0 0.0
    %1051 = vmatprep.subr.mxu0 0.0
    %1052 = vmatpush1.msra.mxu0 0.0
    %1053 = vmatprep.subr.mxu0 0.0
    %1054 = vmatpush1.msra.mxu0 0.0
    %1055 = vmatprep.subr.mxu0 0.0
    %1056 = vmatpush1.msra.mxu0 0.0
    %1057 = vmatprep.subr.mxu0 0.0
    %1058 = vmatpush1.msra.mxu0 0.0
    %1059 = vmatprep.subr.mxu0 0.0
    %1060 = vmatpush1.msra.mxu0 0.0
    %1061 = vmatprep.subr.mxu0 0.0
    %1062 = vmatpush1.msra.mxu0 0.0
    %1063 = vmatprep.subr.mxu0 0.0
    %1064 = vmatpush1.msra.mxu0 0.0
    %1065 = vmatprep.subr.mxu0 0.0
    %1066 = vmatpush1.msra.mxu0 0.0
    %1067 = vmatprep.subr.mxu0 0.0
    %1068 = vmatpush1.msra.mxu0 0.0
    %1069 = vmatprep.subr.mxu0 0.0
    %1070 = vmatpush1.msra.mxu0 0.0
    %1071 = vmatprep.subr.mxu0 0.0
    %1072 = vmatpush1.msra.mxu0 0.0
    %1073 = vmatprep.subr.mxu0 0.0
    %1074 = vmatpush1.msra.mxu0 %v1037
    %1075 = vmatprep.subr.mxu0 0.0
    %1076 = vmatpush1.msra.mxu0 %v1036
    %1077 = vmatprep.subr.mxu0 0.0
    %1078 = vmatpush1.msra.mxu0 %v1035
    %1079 = vmatprep.subr.mxu0 0.0
    %1080 = vmatpush1.msra.mxu0 %v1034
    %1081 = vmatprep.subr.mxu0 0.0
    %1082 = vmatpush2.msra.mxu0 0.0
    %1083 = vmatprep.subr.mxu0 0.0
    %1084 = vmatpush2.msra.mxu0 0.0
    %1085 = vmatprep.subr.mxu0 0.0
    %1086 = vmatpush2.msra.mxu0 0.0
    %1087 = vmatprep.subr.mxu0 0.0
    %1088 = vmatpush2.msra.mxu0 0.0
    %1089 = vmatprep.subr.mxu0 0.0
    %1090 = vmatpush2.msra.mxu0 0.0
    %1091 = vmatprep.subr.mxu0 0.0
    %1092 = vmatpush2.msra.mxu0 0.0
    %1093 = vmatprep.subr.mxu0 0.0
    %1094 = vmatpush2.msra.mxu0 0.0
    %1095 = vmatprep.subr.mxu0 0.0
    %1096 = vmatpush2.msra.mxu0 0.0
    %1097 = vmatprep.subr.mxu0 0.0
    %1098 = vmatpush2.msra.mxu0 0.0
    %1099 = vmatprep.subr.mxu0 0.0
    %1100 = vmatpush2.msra.mxu0 0.0
    %1101 = vmatprep.subr.mxu0 0.0
    %1102 = vmatpush2.msra.mxu0 0.0
    %1103 = vmatprep.subr.mxu0 0.0
    %1104 = vmatpush2.msra.mxu0 0.0
    %1105 = vmatprep.subr.mxu0 0.0
    %1106 = vmatpush2.msra.mxu0 0.0
    %1107 = vmatprep.subr.mxu0 0.0
    %1108 = vmatpush2.msra.mxu0 0.0
    %1109 = vmatprep.subr.mxu0 0.0
    %1110 = vmatpush2.msra.mxu0 0.0
    %1111 = vmatprep.subr.mxu0 0.0
    %1112 = vmatpush2.msra.mxu0 0.0
    %1113 = vmatprep.mubr.f32.mxu0 0.0
    %1114 = vmatmul.mubr.f32.gmra.mxu0 %v1044
    %v1115 = vpop.f32.mrf.mxu0
    %v1116 = vadd.f32 %v1042, %v1115
    %v1117 = vpop.f32.mrf.mxu0
    %1118 = vmatprep.mubr.f32.mxu0 0.0
    %1119 = vmatmul.mubr.f32.gmra.mxu0 %v1047
    %v1120 = vpop.f32.mrf.mxu0
    %v1121 = vadd.f32 %v1042, %v1120
    %v1122 = vpop.f32.mrf.mxu0
    %1123 = vdwg.mxu0
    %1124 = vst.msk [vmem:[%s2] sm:$0xff] %vm326, %v853
    %1125 = vst.msk [vmem:[%s2 + $0x8] sm:$0xff] %vm326, %v854
    %vm1126 = vcmask 523264
    %1127 = vst.msk [vmem:[#allocation7] sm:$0xff] %vm1126, %v1116
    %1128 = vst.msk [vmem:[#allocation7 + $0x8] sm:$0xff] %vm1126, %v1121
    // Predicated region
    $region18: #{tpu_custom_call.1} parent=1 // pred_check
      _
    $region19: #{tpu_custom_call.1} parent=1 // pred_check_branch
      %1130 = sbr.rel (0) target = $region21
    $region20: #{tpu_custom_call.1} parent=1 // pred_region
      _
    $region21: #{tpu_custom_call.1} parent=1 // pred_fallthru
      _
    // Predicated region
    $region22: #{tpu_custom_call.1} parent=1 // pred_check
      _
    $region23: #{tpu_custom_call.1} parent=1 // pred_check_branch
      %1132 = sbr.rel (0) target = $region25
    $region24: #{tpu_custom_call.1} parent=1 // pred_region
      %s1134 = ssub.s32 256, 256
      %1135 = vsyncadd [#allocation4], %s1134
      %s1136 = sshll.u32 [#allocation7], 4
      %s1137 = int_to_ptr.vmem [resolvable:$true] %s1136
      %1142 = dma.vmem_to_hbm [thread:$0]  %s1137, 256, %s3, [#allocation4], 128, 128, 8
    $region25: #{tpu_custom_call.1} parent=1 // pred_fallthru
      _
    // Predicated region
    $region26: #{tpu_custom_call.1} parent=1 // pred_check
      _
    $region27: #{tpu_custom_call.1} parent=1 // pred_check_branch
      %1144 = sbr.rel (0) target = $region29
    $region28: #{tpu_custom_call.1} parent=1 // pred_region
      _
    $region29: #{tpu_custom_call.1} parent=1 // pred_fallthru
      _
    // Predicated region
    $region30: #{tpu_custom_call.1} parent=1 // pred_check
      _
    $region31: #{tpu_custom_call.1} parent=1 // pred_check_branch
      %1146 = sbr.rel (0) target = $region33
    $region32: #{tpu_custom_call.1} parent=1 // pred_region
      %1147 = dma.done [#allocation4], 256
    $region33: #{tpu_custom_call.1} parent=1 // pred_fallthru
      _
    %1148 = vsyncpa [#allocation3], 1
    %1149 = vsyncpa [#allocation6], 1
    %1150 = vsyncpa [#allocation4], 1

</llo_original>
